<compile_context>
chip_gen: v7x
topology: tpu7x:2x2x1
jax: 0.10.0
libtpu: 0.0.40
codegen_flags: <defaults>
</compile_context>

<pallas_src>
import jax
import jax.numpy as jnp
from jax.experimental import pallas as pl
from jax.experimental.pallas import tpu as pltpu

LANES = 128                       # lane-dense last dim (one full vreg lane width)
TILE_BYTES = 4 * 1024 * 1024      # ~4 MiB per operand tile (dtype-independent)
VMEM_LIMIT = 48 * 1024 * 1024     # 3 operands x 2 buffers x 4 MiB = 24 MiB used


def _round_up(x, m):
    return (x + m - 1) // m * m


def mix_kernel(mf_ref, f1_ref, f2_ref, o_ref):
    # mf_ref: (1,) f32 in SMEM holding sigmoid(w), precomputed once in the wrapper.
    mf = mf_ref[0]
    f1 = f1_ref[...].astype(jnp.float32)
    f2 = f2_ref[...].astype(jnp.float32)
    # Same association as the PyTorch reference: fea1*mf + fea2*(1-mf).
    o_ref[...] = (f1 * mf + f2 * (1.0 - mf)).astype(o_ref.dtype)


def _mix_pallas_2d(f1_2d, f2_2d, mf_arr, out_dtype):
    rows = f1_2d.shape[0]
    itemsize = jnp.dtype(f1_2d.dtype).itemsize
    tr_max = max(8, TILE_BYTES // (LANES * itemsize))   # dtype-scaled tile rows
    if rows <= 8:
        tr = rows                                       # single tiny block (= full dim)
    else:
        # >= 2 blocks so the "parallel" grid axis can shard over v7x's two TCs,
        # capped at the ~4 MiB-per-operand DMA sweet spot.
        tr = min(tr_max, _round_up(pl.cdiv(rows, 2), 8))
    grid = (pl.cdiv(rows, tr),)
    return pl.pallas_call(
        mix_kernel,
        out_shape=jax.ShapeDtypeStruct((rows, LANES), out_dtype),
        grid=grid,
        in_specs=[
            pl.BlockSpec(memory_space=pltpu.MemorySpace.SMEM),    # sigmoid(w) scalar
            pl.BlockSpec((tr, LANES), lambda i: (i, 0)),          # fea1 tile
            pl.BlockSpec((tr, LANES), lambda i: (i, 0)),          # fea2 tile
        ],
        out_specs=pl.BlockSpec((tr, LANES), lambda i: (i, 0)),
        compiler_params=pltpu.CompilerParams(
            dimension_semantics=("parallel",),   # v7x: shard blocks over both TCs
            vmem_limit_bytes=VMEM_LIMIT,         # above v5e's 16 MiB default, below v7x's 64 MiB
        ),
    )(mf_arr, f1_2d, f2_2d)


def mix(fea1, fea2, w):
    """Pallas implementation of Mix.forward(fea1, fea2)."""
    assert fea1.shape == fea2.shape, "fea1/fea2 must have the same shape"
    assert fea1.dtype == fea2.dtype, "fea1/fea2 must have the same dtype"
    orig_shape = fea1.shape
    out_dtype = fea1.dtype
    n = fea1.size

    # mix_factor = sigmoid(w): one scalar, computed in the wrapper, passed via SMEM.
    mf = jax.nn.sigmoid(jnp.asarray(w, jnp.float32).reshape(-1)[0])
    mf_arr = mf.reshape(1)

    f1 = fea1.reshape(-1)            # zero-copy flatten of contiguous NCHW input
    f2 = fea2.reshape(-1)

    rem = n % LANES
    bulk = n - rem

    if rem == 0:
        rows = n // LANES
        out = _mix_pallas_2d(f1.reshape(rows, LANES), f2.reshape(rows, LANES),
                             mf_arr, out_dtype)
        return out.reshape(orig_shape)

    # Ragged size: divisible bulk goes through the kernel; the (<128 element)
    # tail is blended in plain JAX.  No full-tensor jnp.pad / output slice.
    parts = []
    if bulk:
        rows = bulk // LANES
        out_bulk = _mix_pallas_2d(f1[:bulk].reshape(rows, LANES),
                                  f2[:bulk].reshape(rows, LANES),
                                  mf_arr, out_dtype)
        parts.append(out_bulk.reshape(-1))
    t1 = f1[bulk:].astype(jnp.float32)
    t2 = f2[bulk:].astype(jnp.float32)
    parts.append((t1 * mf + t2 * (1.0 - mf)).astype(out_dtype))
    return jnp.concatenate(parts).reshape(orig_shape)


if __name__ == "__main__":
    # Deterministic parameter init, matching Mix(m=-0.8)
    m = -0.8
    w_param = jnp.array([m], dtype=jnp.float32)

    key = jax.random.PRNGKey(0)
    k1, k2, k3, k4 = jax.random.split(key, 4)

    # Main check: small NCHW activation (numel % 128 == 0 -> pure Pallas path).
    B, C, H, W = 2, 4, 16, 16
    fea1 = jax.random.normal(k1, (B, C, H, W), dtype=jnp.float32)
    fea2 = jax.random.normal(k2, (B, C, H, W), dtype=jnp.float32)
    out = jax.block_until_ready(mix(fea1, fea2, w_param))

    mf_ref = jax.nn.sigmoid(w_param[0])
    ref = fea1 * mf_ref + fea2 * (1.0 - mf_ref)
    assert out.shape == (B, C, H, W)
    assert jnp.allclose(out, ref, atol=1e-6, rtol=1e-6)

    # Ragged check: numel % 128 != 0 exercises the bulk-kernel + JAX-tail path.
    g1 = jax.random.normal(k3, (2, 3, 5, 7), dtype=jnp.float32)
    g2 = jax.random.normal(k4, (2, 3, 5, 7), dtype=jnp.float32)
    out2 = jax.block_until_ready(mix(g1, g2, w_param))
    ref2 = g1 * mf_ref + g2 * (1.0 - mf_ref)
    assert jnp.allclose(out2, ref2, atol=1e-6, rtol=1e-6)

    print("KERNEL_OK")
</pallas_src>

<mosaic_0001>
module attributes {stable_mosaic.version = 11 : i64} {
  func.func @mix_kernel(%arg0: i32, %arg1: memref<1xf32, #tpu.memory_space<smem>>, %arg2: memref<8x128xf32, #tpu.memory_space<vmem>>, %arg3: memref<8x128xf32, #tpu.memory_space<vmem>>, %arg4: memref<8x128xf32, #tpu.memory_space<vmem>>) attributes {dimension_semantics = [#tpu.dimension_semantics<parallel>], iteration_bounds = array<i64: 2>, scalar_prefetch = 0 : i64, scratch_operands = 0 : i64, tpu.core_type = #tpu.core_type<tc>, window_params = [{transform_indices = @transform_0, window_bounds = array<i64: 1>}, {transform_indices = @transform_1, window_bounds = array<i64: 8, 128>}, {transform_indices = @transform_2, window_bounds = array<i64: 8, 128>}, {transform_indices = @transform_3, window_bounds = array<i64: 8, 128>}]} {
    %c0 = arith.constant 0 : index
    %0 = memref.load %arg1[%c0] : memref<1xf32, #tpu.memory_space<smem>>
    %c0_0 = arith.constant 0 : index
    %c0_1 = arith.constant 0 : index
    %1 = vector.load %arg2[%c0_0, %c0_1] : memref<8x128xf32, #tpu.memory_space<vmem>>, vector<8x128xf32>
    %c0_2 = arith.constant 0 : index
    %c0_3 = arith.constant 0 : index
    %2 = vector.load %arg3[%c0_2, %c0_3] : memref<8x128xf32, #tpu.memory_space<vmem>>, vector<8x128xf32>
    %3 = vector.broadcast %0 : f32 to vector<8x128xf32>
    %4 = arith.mulf %1, %3 : vector<8x128xf32>
    %cst = arith.constant 1.000000e+00 : f32
    %5 = arith.subf %cst, %0 : f32
    %6 = vector.broadcast %5 : f32 to vector<8x128xf32>
    %7 = arith.mulf %2, %6 : vector<8x128xf32>
    %8 = arith.addf %4, %7 : vector<8x128xf32>
    %c0_4 = arith.constant 0 : index
    %c0_5 = arith.constant 0 : index
    %9 = vector.load %arg4[%c0_4, %c0_5] : memref<8x128xf32, #tpu.memory_space<vmem>>, vector<8x128xf32>
    tpu.vector_store %arg4[%c0_4, %c0_5], %8 {strides = array<i32>} : memref<8x128xf32, #tpu.memory_space<vmem>>, vector<8x128xf32>,
    return
  }
  func.func @transform_0(%arg0: i32) -> i32 {
    %c0_i32 = arith.constant 0 : i32
    %c0_i32_0 = arith.constant 0 : i32
    return %c0_i32 : i32
  }
  func.func @transform_1(%arg0: i32) -> (i32, i32) {
    %c0_i32 = arith.constant 0 : i32
    %c0_i32_0 = arith.constant 0 : i32
    return %arg0, %c0_i32 : i32, i32
  }
  func.func @transform_2(%arg0: i32) -> (i32, i32) {
    %c0_i32 = arith.constant 0 : i32
    %c0_i32_0 = arith.constant 0 : i32
    return %arg0, %c0_i32 : i32, i32
  }
  func.func @transform_3(%arg0: i32) -> (i32, i32) {
    %c0_i32 = arith.constant 0 : i32
    %c0_i32_0 = arith.constant 0 : i32
    return %arg0, %c0_i32 : i32, i32
  }
}

</mosaic_0001>

<llo_original>
// kernel: tpu_custom_call.1
$region0: #{tpu_custom_call.1}
  #allocation0 [shape = 'u32[]', space=smem, size = 0x4, offset = 0x4, fixed_abs, tag = 'smem constant byte address 0x4 - core index']
  #allocation1 [shape = 'u32[144,128]{1,0:T(1,128)}', space=vmem, size = 0x12000, scoped, tag = 'internal scratch']
  #allocation2 [shape = 'f32[1]{0:T(128)S(6)}', space=smem, size = 0x200, scoped, tag = 'scoped memory for tpu_custom_call.1']
  %s0 = inlined_call_operand.<no memory space> [shape: f32[1], index: 0, kind: input, shape index: {}]
  %s1 = inlined_call_operand.hbm [shape: f32[16,128], index: 1, kind: input, shape index: {}]
  %s2 = inlined_call_operand.hbm [shape: f32[16,128], index: 2, kind: input, shape index: {}]
  %s3 = inlined_call_operand.hbm [shape: f32[16,128], index: 3, kind: output, shape index: {}]
  %s4 = sld [smem:[#allocation0]]
  $region53: #{tpu_custom_call.1} parent=0
    _
  %s6 = ssub.s32 1, %s4
  %s7 = scalar_select 0, %s6, %s4
  %8 = sst [smem:[#allocation2]] %s0
  $region1: #{tpu_custom_call.1} parent=0
    #allocation3 [shape = 'u8[8192]{0}', space=vmem, size = 0x2000, scoped, tag = 'input window, operand 1']
    #allocation4 [shape = 's32[2]{0}', space=sflag, size = 0x8, scoped, tag = 'scoped memory for tpu_custom_call.1']
    #allocation5 [shape = 's32[2]{0}', space=sflag, size = 0x8, scoped, tag = 'scoped memory for tpu_custom_call.1']
    #allocation6 [shape = 'u8[8192]{0}', space=vmem, size = 0x2000, scoped, tag = 'input window, operand 2']
    #allocation7 [shape = 's32[2]{0}', space=sflag, size = 0x8, scoped, tag = 'scoped memory for tpu_custom_call.1']
    #allocation8 [shape = 'u8[8192]{0}', space=vmem, size = 0x2000, scoped, tag = 'output window, operand 0']
    %9 = vsyncpa [#allocation4], 0
    %s10 = scalar_lea.sflag [#allocation4], 1
    %11 = vsyncpa %s10, 0
    %12 = vsyncpa [#allocation7], 0
    %s13 = scalar_lea.sflag [#allocation7], 1
    %14 = vsyncpa %s13, 0
    %15 = vsyncpa [#allocation5], 0
    %s16 = scalar_lea.sflag [#allocation5], 1
    %17 = vsyncpa %s16, 0
    loop: start=0, step=1, limit=4
    $region2: #{tpu_custom_call.1} parent=1 // loop_pre_header
      _
    $region3: #{tpu_custom_call.1} parent=1 // loop_header
      %s19 = sphi 0, %s23
      %p20 = scmp.ge.s32.totalorder %s19, 4
      %s27 = sphi 0, %s27
      %s29 = sphi 0, %s27
      %s30 = sphi 0, %s29
      %s44 = sphi 0, %s30
      %s50 = sphi 0, %s52
      %s53 = sphi 0, %s50
      %s54 = sphi 0, %s53
      %s70 = sphi 0, %s54
      %s76 = sphi 0, %s78
      %s79 = sphi 0, %s76
      %s80 = sphi 0, %s79
      %s96 = sphi 0, %s80
      %s102 = sphi 0, %s104
      %s105 = sphi 0, %s102
      %s106 = sphi 0, %s105
      %s122 = sphi 0, %s106
    $region4: #{tpu_custom_call.1} parent=1 // loop_header_branch
      %22 = sbr.rel (%p20) target = $region8
    $region5: #{tpu_custom_call.1} parent=1 // loop_body
      %s24 = ssub.s32 %s19, 1
      %s25 = ssub.s32 %s19, 2
      %s26 = sadd.s32 %s19, 1
      %s28 = sadd.s32 %s27, 1
      %p31 = scmp.eq.s32.totalorder %s19, 1
      %p32 = scmp.ne.s32.totalorder %s27, %s29
      %p33 = scmp.eq.s32.totalorder %s19, 0
      %p34 = por %p32, %p33
      %p35 = scmp.ne.s32.totalorder %s27, %s29
      %p36 = scmp.eq.s32.totalorder %s24, 1
      %p37 = por %p35, %p36
      %p38 = scmp.ne.s32.totalorder %s29, %s30
      %p39 = scmp.eq.s32.totalorder %s24, 0
      %p40 = por %p38, %p39
      %p41 = scmp.ne.s32.totalorder %s29, %s30
      %p42 = scmp.eq.s32.totalorder %s25, 1
      %p43 = por %p41, %p42
      %p45 = scmp.ne.s32.totalorder %s30, %s44
      %p46 = scmp.eq.s32.totalorder %s25, 0
      %p47 = por %p45, %p46
      %s48 = ssub.s32 %s19, %s26
      %p49 = scmp.eq.s32.totalorder %s48, 0
      %s51 = sadd.s32 %s50, 1
      %s52 = scalar_select %p49, %s50, %s51
      %p55 = pneg %p49
      %p56 = scmp.eq.s32.totalorder %s19, 1
      %p57 = por %p55, %p56
      %p58 = scmp.ne.s32.totalorder %s50, %s53
      %p59 = scmp.eq.s32.totalorder %s19, 0
      %p60 = por %p58, %p59
      %p61 = scmp.ne.s32.totalorder %s50, %s53
      %p62 = scmp.eq.s32.totalorder %s24, 1
      %p63 = por %p61, %p62
      %p64 = scmp.ne.s32.totalorder %s53, %s54
      %p65 = scmp.eq.s32.totalorder %s24, 0
      %p66 = por %p64, %p65
      %p67 = scmp.ne.s32.totalorder %s53, %s54
      %p68 = scmp.eq.s32.totalorder %s25, 1
      %p69 = por %p67, %p68
      %p71 = scmp.ne.s32.totalorder %s54, %s70
      %p72 = scmp.eq.s32.totalorder %s25, 0
      %p73 = por %p71, %p72
      %s74 = ssub.s32 %s19, %s26
      %p75 = scmp.eq.s32.totalorder %s74, 0
      %s77 = sadd.s32 %s76, 1
      %s78 = scalar_select %p75, %s76, %s77
      %p81 = pneg %p75
      %p82 = scmp.eq.s32.totalorder %s19, 1
      %p83 = por %p81, %p82
      %p84 = scmp.ne.s32.totalorder %s76, %s79
      %p85 = scmp.eq.s32.totalorder %s19, 0
      %p86 = por %p84, %p85
      %p87 = scmp.ne.s32.totalorder %s76, %s79
      %p88 = scmp.eq.s32.totalorder %s24, 1
      %p89 = por %p87, %p88
      %p90 = scmp.ne.s32.totalorder %s79, %s80
      %p91 = scmp.eq.s32.totalorder %s24, 0
      %p92 = por %p90, %p91
      %p93 = scmp.ne.s32.totalorder %s79, %s80
      %p94 = scmp.eq.s32.totalorder %s25, 1
      %p95 = por %p93, %p94
      %p97 = scmp.ne.s32.totalorder %s80, %s96
      %p98 = scmp.eq.s32.totalorder %s25, 0
      %p99 = por %p97, %p98
      %s100 = ssub.s32 %s19, %s26
      %p101 = scmp.eq.s32.totalorder %s100, 0
      %s103 = sadd.s32 %s102, 1
      %s104 = scalar_select %p101, %s102, %s103
      %p107 = pneg %p101
      %p108 = scmp.eq.s32.totalorder %s19, 1
      %p109 = por %p107, %p108
      %p110 = scmp.ne.s32.totalorder %s102, %s105
      %p111 = scmp.eq.s32.totalorder %s19, 0
      %p112 = por %p110, %p111
      %p113 = scmp.ne.s32.totalorder %s102, %s105
      %p114 = scmp.eq.s32.totalorder %s24, 1
      %p115 = por %p113, %p114
      %p116 = scmp.ne.s32.totalorder %s105, %s106
      %p117 = scmp.eq.s32.totalorder %s24, 0
      %p118 = por %p116, %p117
      %p119 = scmp.ne.s32.totalorder %s105, %s106
      %p120 = scmp.eq.s32.totalorder %s25, 1
      %p121 = por %p119, %p120
      %p123 = scmp.ne.s32.totalorder %s106, %s122
      %p124 = scmp.eq.s32.totalorder %s25, 0
      %p125 = por %p123, %p124
      %p126 = scmp.le.s32.totalorder 1, %s19
      %p127 = scmp.lt.s32.totalorder %s19, 3
      %p128 = pnand %p126, %p127
      %p129 = pneg %p128
      // Predicated region
      $region9: #{tpu_custom_call.1} parent=5 // pred_check
        _
      $region10: #{tpu_custom_call.1} parent=5 // pred_check_branch
        %131 = sbr.rel (%p128) target = $region12
      $region11: #{tpu_custom_call.1} parent=5 // pred_region
        %s132 = ssub.s32 %s19, 1
        // Predicated region
        $region13: #{tpu_custom_call.1} parent=11 // pred_check
          %p133 = pneg %p40
        $region14: #{tpu_custom_call.1} parent=11 // pred_check_branch
          %135 = sbr.rel (%p133) target = $region16
        $region15: #{tpu_custom_call.1} parent=11 // pred_region
          _
        $region16: #{tpu_custom_call.1} parent=11 // pred_fallthru
          _
      $region12: #{tpu_custom_call.1} parent=5 // pred_fallthru
        _
      %p136 = scmp.lt.s32.totalorder %s19, 2
      // Predicated region
      $region17: #{tpu_custom_call.1} parent=5 // pred_check
        %p137 = pneg %p136
      $region18: #{tpu_custom_call.1} parent=5 // pred_check_branch
        %139 = sbr.rel (%p137) target = $region20
      $region19: #{tpu_custom_call.1} parent=5 // pred_region
        // Predicated region
        $region21: #{tpu_custom_call.1} parent=19 // pred_check
          %p140 = pneg %p60
        $region22: #{tpu_custom_call.1} parent=19 // pred_check_branch
          %142 = sbr.rel (%p140) target = $region24
        $region23: #{tpu_custom_call.1} parent=19 // pred_region
          %s143 = sand.u32 %s50, 1
          %s144 = scalar_lea.sflag [#allocation4], %s143
          %s145 = sand.u32 %s50, 1
          %s146 = smul.addr %s145, 8
          %s147 = scalar_lea.vmem [#allocation3], %s146
          %s149 = ssub.s32 128, 128
          %150 = vsyncadd %s144, %s149
          %s151 = smul.addr %s19, 128
          %s152 = scalar_lea.hbm %s1, %s151
          %s154 = sshll.u32 %s147, 4
          %s155 = int_to_ptr.vmem [resolvable:$true] %s154
          %157 = dma.hbm_to_vmem [thread:$0]  %s152, 128, %s155, %s144
        $region24: #{tpu_custom_call.1} parent=19 // pred_fallthru
          _
        // Predicated region
        $region25: #{tpu_custom_call.1} parent=19 // pred_check
          %p158 = pneg %p86
        $region26: #{tpu_custom_call.1} parent=19 // pred_check_branch
          %160 = sbr.rel (%p158) target = $region28
        $region27: #{tpu_custom_call.1} parent=19 // pred_region
          %s161 = sand.u32 %s76, 1
          %s162 = scalar_lea.sflag [#allocation7], %s161
          %s163 = sand.u32 %s76, 1
          %s164 = smul.addr %s163, 8
          %s165 = scalar_lea.vmem [#allocation6], %s164
          %s167 = ssub.s32 128, 128
          %168 = vsyncadd %s162, %s167
          %s169 = smul.addr %s19, 128
          %s170 = scalar_lea.hbm %s2, %s169
          %s172 = sshll.u32 %s165, 4
          %s173 = int_to_ptr.vmem [resolvable:$true] %s172
          %175 = dma.hbm_to_vmem [thread:$0]  %s170, 128, %s173, %s162
        $region28: #{tpu_custom_call.1} parent=19 // pred_fallthru
          _
      $region20: #{tpu_custom_call.1} parent=5 // pred_fallthru
        _
      %p176 = scmp.le.s32.totalorder 1, %s19
      %p177 = scmp.lt.s32.totalorder %s19, 3
      %p178 = pnand %p176, %p177
      %p179 = pneg %p178
      // Predicated region
      $region29: #{tpu_custom_call.1} parent=5 // pred_check
        _
      $region30: #{tpu_custom_call.1} parent=5 // pred_check_branch
        %181 = sbr.rel (%p178) target = $region32
      $region31: #{tpu_custom_call.1} parent=5 // pred_region
        %s182 = ssub.s32 %s19, 1
        %s183 = sand.u32 %s53, 1
        %s184 = scalar_lea.sflag [#allocation4], %s183
        %s185 = sand.u32 %s53, 1
        %s186 = smul.addr %s185, 8
        %s187 = scalar_lea.vmem [#allocation3], %s186
        // Predicated region
        $region33: #{tpu_custom_call.1} parent=31 // pred_check
          %p188 = pneg %p66
        $region34: #{tpu_custom_call.1} parent=31 // pred_check_branch
          %190 = sbr.rel (%p188) target = $region36
        $region35: #{tpu_custom_call.1} parent=31 // pred_region
          %191 = dma.done %s184, 128
        $region36: #{tpu_custom_call.1} parent=31 // pred_fallthru
          _
        %s192 = sand.u32 %s79, 1
        %s193 = scalar_lea.sflag [#allocation7], %s192
        %s194 = sand.u32 %s79, 1
        %s195 = smul.addr %s194, 8
        %s196 = scalar_lea.vmem [#allocation6], %s195
        // Predicated region
        $region37: #{tpu_custom_call.1} parent=31 // pred_check
          %p197 = pneg %p92
        $region38: #{tpu_custom_call.1} parent=31 // pred_check_branch
          %199 = sbr.rel (%p197) target = $region40
        $region39: #{tpu_custom_call.1} parent=31 // pred_region
          %200 = dma.done %s193, 128
        $region40: #{tpu_custom_call.1} parent=31 // pred_fallthru
          _
        %p201 = pneg %p40
        %p202 = pneg %p37
        %s203 = sand.u32 %s53, 1
        %s204 = scalar_lea.sflag [#allocation4], %s203
        %s205 = sand.u32 %s53, 1
        %s206 = smul.addr %s205, 8
        %s207 = scalar_lea.vmem [#allocation3], %s206
        %p208 = pneg %p66
        %p209 = pneg %p63
        %s210 = sand.u32 %s79, 1
        %s211 = scalar_lea.sflag [#allocation7], %s210
        %s212 = sand.u32 %s79, 1
        %s213 = smul.addr %s212, 8
        %s214 = scalar_lea.vmem [#allocation6], %s213
        %p215 = pneg %p92
        %p216 = pneg %p89
        %p217 = pneg %p118
        %p218 = pneg %p115
        %s219 = sand.u32 %s105, 1
        %s220 = scalar_lea.sflag [#allocation5], %s219
        %s221 = sand.u32 %s105, 1
        %s222 = smul.addr %s221, 8
        %s223 = scalar_lea.vmem [#allocation8], %s222
        %s224 = sld [smem:[#allocation2]]
        %v225 = vld [vmem:[%s187] sm:$0xff]
        %v226 = vld [vmem:[%s196] sm:$0xff]
        %v227 = vstv %s224
        %v228 = vmul.f32 %v225, %v227
        %s229 = ssub.f32 1.0, %s224
        %v230 = vstv %s229
        %v231 = vmul.f32 %v226, %v230
        %v232 = vadd.f32 %v228, %v231
        %233 = vst [vmem:[%s223] sm:$0xff] %v232
        %s234 = sand.u32 %s105, 1
        %s235 = scalar_lea.sflag [#allocation5], %s234
        %s236 = sand.u32 %s105, 1
        %s237 = smul.addr %s236, 8
        %s238 = scalar_lea.vmem [#allocation8], %s237
        // Predicated region
        $region41: #{tpu_custom_call.1} parent=31 // pred_check
          %p239 = pneg %p115
        $region42: #{tpu_custom_call.1} parent=31 // pred_check_branch
          %241 = sbr.rel (%p239) target = $region44
        $region43: #{tpu_custom_call.1} parent=31 // pred_region
          %s243 = ssub.s32 128, 128
          %244 = vsyncadd %s235, %s243
          %s245 = smul.addr %s24, 128
          %s246 = scalar_lea.hbm %s3, %s245
          %s248 = sshll.u32 %s238, 4
          %s249 = int_to_ptr.vmem [resolvable:$true] %s248
          %251 = dma.vmem_to_hbm [thread:$0]  %s249, 128, %s246, %s235
        $region44: #{tpu_custom_call.1} parent=31 // pred_fallthru
          _
      $region32: #{tpu_custom_call.1} parent=5 // pred_fallthru
        _
      %p252 = scmp.le.s32.totalorder 2, %s19
      // Predicated region
      $region45: #{tpu_custom_call.1} parent=5 // pred_check
        %p253 = pneg %p252
      $region46: #{tpu_custom_call.1} parent=5 // pred_check_branch
        %255 = sbr.rel (%p253) target = $region48
      $region47: #{tpu_custom_call.1} parent=5 // pred_region
        %s256 = ssub.s32 %s19, 2
        // Predicated region
        $region49: #{tpu_custom_call.1} parent=47 // pred_check
          %p257 = pneg %p121
        $region50: #{tpu_custom_call.1} parent=47 // pred_check_branch
          %259 = sbr.rel (%p257) target = $region52
        $region51: #{tpu_custom_call.1} parent=47 // pred_region
          %s260 = sand.u32 %s106, 1
          %s261 = scalar_lea.sflag [#allocation5], %s260
          %s262 = sand.u32 %s106, 1
          %s263 = smul.addr %s262, 8
          %s264 = scalar_lea.vmem [#allocation8], %s263
          %265 = dma.done %s261, 128
        $region52: #{tpu_custom_call.1} parent=47 // pred_fallthru
          _
      $region48: #{tpu_custom_call.1} parent=5 // pred_fallthru
        _
    $region6: #{tpu_custom_call.1} parent=1 // loop_footer
      %s23 = sadd.s32 1, %s19
    $region7: #{tpu_custom_call.1} parent=1 // loop_footer_branch
      %18 = sbr.rel target = $region3
    $region8: #{tpu_custom_call.1} parent=1 // loop_exit
      _
    %266 = vsyncpa [#allocation4], 1
    %s267 = scalar_lea.sflag [#allocation4], 1
    %268 = vsyncpa %s267, 1
    %269 = vsyncpa [#allocation7], 1
    %s270 = scalar_lea.sflag [#allocation7], 1
    %271 = vsyncpa %s270, 1
    %272 = vsyncpa [#allocation5], 1
    %s273 = scalar_lea.sflag [#allocation5], 1
    %274 = vsyncpa %s273, 1

</llo_original>
